<compile_context>
chip_gen: v6e
topology: v6e:2x2x1
jax: 0.10.0
libtpu: 0.0.40
codegen_flags: <defaults>
</compile_context>

<pallas_src>
import math

import jax
import jax.numpy as jnp
import numpy as np
from jax.experimental import pallas as pl
from jax.experimental.pallas import tpu as pltpu

# ---------------------------- static config ----------------------------
B, CIN, H, W = 2, 3, 16, 16          # input: (batch, channels, height, width)
COUT = 32                            # stem conv output channels
NA, NC = 3, 3                        # anchors per cell, number of classes
NO = NC + 5                          # outputs per anchor (x, y, w, h, obj, cls...)
A = NA * NO                          # detect-head channel count (27)
AP = 32                              # A padded to a lane-friendly 32-block
K9 = 9 * CIN                         # im2col contraction dim (27)
KP = 32                              # K padded (col 27 carries the folded conv bias)
STRIDE = 8.0                         # detection stride (pixels per cell)
N = B * H * W                        # flattened spatial rows (512)
GRP = 4                              # spatial rows packed per lane-dense row
LANES = GRP * AP                     # 128 (full lane width)
GRP_SHIFT = int(math.log2(AP))       # lane -> row-group  (lane >> 5)
ROW_SHIFT = int(math.log2(GRP))      # packed row -> flat row (row << 2)
W_SHIFT = int(math.log2(W))
N4 = N // GRP                        # 128 lane-dense rows

assert K9 < KP and A < AP
assert GRP * KP == LANES and GRP * AP == LANES
assert W & (W - 1) == 0 and H & (H - 1) == 0
assert N % GRP == 0 and N4 % 8 == 0


def _num_row_tiles():
    """2 parallel row tiles on v7x (2 TensorCores/chip); 1 elsewhere to avoid
    per-grid-step pipeline overhead on single-TC chips (v5e/v6e)."""
    try:
        kind = jax.devices()[0].device_kind.lower()
    except Exception:
        return 1
    return 2 if "v7" in kind else 1


# ---------------------------- fused Pallas kernel ----------------------------
def _fused_kernel(patch_ref, wc_ref, wd_ref, tbl_ref, o_ref):
    """Lane-dense fused stem-conv + SiLU + detect-head + sigmoid + box decode.

    patch_ref: (TN4, 128)  4 interleaved rows of 32-wide im2col patches
                           (per-32-block col 27 == 1.0 carries the conv bias)
    wc_ref   : (128, 128)  4-way block-diagonal conv weight (bias folded in row 27)
    wd_ref   : (128, 128)  4-way block-diagonal detect-head weight
    tbl_ref  : (8, 128)    constant rows: [b_det, qa, qb, qc, xm, ym, 0, 0]
    o_ref    : (TN4, 128)  lane-dense decoded detections
    """
    tn4 = o_ref.shape[0]
    lanes = o_ref.shape[1]

    # --- s-independent additive decode term (computed first: fewer live vregs)
    base = pl.program_id(0) * tn4
    row4 = base + jax.lax.broadcasted_iota(jnp.int32, (tn4, lanes), 0)
    grp = jax.lax.broadcasted_iota(jnp.int32, (tn4, lanes), 1) >> GRP_SHIFT
    ridx = (row4 << ROW_SHIFT) | grp                 # global flat row = b*H*W + y*W + x
    gx = (ridx & (W - 1)).astype(jnp.float32)        # cell x  (power-of-two bit ops)
    gy = ((ridx >> W_SHIFT) & (H - 1)).astype(jnp.float32)   # cell y
    add = tbl_ref[3:4, :] + gx * tbl_ref[4:5, :] + gy * tbl_ref[5:6, :]

    # --- stem: 3x3 conv (im2col, bias folded) as one MXU matmul, then SiLU.
    z1 = jnp.dot(patch_ref[...], wc_ref[...], preferred_element_type=jnp.float32)
    feat = z1 * jax.nn.sigmoid(z1)                   # stays in vregs/VMEM

    # --- detect head: second MXU matmul + bias + sigmoid.
    z2 = jnp.dot(feat, wd_ref[...], preferred_element_type=jnp.float32) + tbl_ref[0:1, :]
    s = jax.nn.sigmoid(z2)

    # --- YOLO decode in pure-FMA form:  out = s*(s*qa + qb) + (qc + gx*xm + gy*ym)
    o_ref[...] = s * (s * tbl_ref[1:2, :] + tbl_ref[2:3, :]) + add


# ---------------------------- pallas_call wrapper ----------------------------
def _fused_detect(patches, params):
    n4, lanes = patches.shape
    assert lanes == LANES

    ntiles = _num_row_tiles()
    if n4 % ntiles or (n4 // ntiles) % 8:
        ntiles = 1
    tn4 = n4 // ntiles

    flops = 2 * 2 * n4 * LANES * LANES               # two (n4,128)@(128,128) matmuls
    transcendentals = 2 * n4 * LANES                 # two sigmoids per element
    bytes_accessed = 4 * (2 * n4 * LANES + 2 * LANES * LANES + 8 * LANES)
    cost = pl.CostEstimate(flops=flops, transcendentals=transcendentals,
                           bytes_accessed=bytes_accessed)

    return pl.pallas_call(
        _fused_kernel,
        out_shape=jax.ShapeDtypeStruct((n4, LANES), jnp.float32),
        grid=(ntiles,),
        in_specs=[pl.BlockSpec((tn4, LANES), lambda i: (i, 0)),
                  pl.BlockSpec((LANES, LANES), lambda i: (0, 0)),
                  pl.BlockSpec((LANES, LANES), lambda i: (0, 0)),
                  pl.BlockSpec((8, LANES), lambda i: (0, 0))],
        out_specs=pl.BlockSpec((tn4, LANES), lambda i: (i, 0)),
        compiler_params=pltpu.CompilerParams(
            dimension_semantics=("parallel",)),
        cost_estimate=cost,
    )(patches, params["wc_block"], params["wd_block"], params["tbl"])


# ---------------------------- parameter / decode-table setup (glue) ----------------------------
def make_params(key):
    k1, k2, k3, k4 = jax.random.split(key, 4)
    w_conv = 0.1 * jax.random.normal(k1, (K9, COUT), jnp.float32)     # (27, 32)
    b_conv = 0.1 * jax.random.normal(k2, (1, COUT), jnp.float32)
    w_det = 0.1 * jax.random.normal(k3, (COUT, A), jnp.float32)       # (32, 27)
    b_det = 0.1 * jax.random.normal(k4, (1, A), jnp.float32)

    w_conv_np = np.asarray(w_conv)
    b_conv_np = np.asarray(b_conv)
    w_det_np = np.asarray(w_det)
    b_det_np = np.asarray(b_det)

    # Conv weight padded (KP, COUT); the conv bias is folded into row K9 (=27)
    # which multiplies the constant-1.0 bias column appended in _im2col_patches.
    wc_p = np.zeros((KP, COUT), np.float32)
    wc_p[:K9, :] = w_conv_np
    wc_p[K9, :] = b_conv_np[0]

    wd_p = np.zeros((COUT, AP), np.float32)
    wd_p[:, :A] = w_det_np
    bd_p = np.zeros((AP,), np.float32)
    bd_p[:A] = b_det_np[0]

    # 4-way block-diagonal lane-dense weights (128, 128).
    wc_block = np.zeros((GRP * KP, GRP * COUT), np.float32)
    wd_block = np.zeros((GRP * COUT, GRP * AP), np.float32)
    for j in range(GRP):
        wc_block[j * KP:(j + 1) * KP, j * COUT:(j + 1) * COUT] = wc_p
        wd_block[j * COUT:(j + 1) * COUT, j * AP:(j + 1) * AP] = wd_p

    # YOLOv5 P3 anchors (pixels).
    anchors_px = np.array([[10., 13.], [16., 30.], [33., 23.]], np.float32)

    # FMA-form decode tables (per 32-block):  out = s*s*qa + s*qb + qc + gx*xm + gy*ym
    qa = np.zeros((AP,), np.float32)
    qb = np.zeros((AP,), np.float32)
    qc = np.zeros((AP,), np.float32)
    xm = np.zeros((AP,), np.float32)
    ym = np.zeros((AP,), np.float32)
    for a in range(NA):
        base = a * NO
        # xy: (s*2 - 0.5 + g) * STRIDE = 2*STRIDE*s - 0.5*STRIDE + g*STRIDE
        qb[base + 0] = 2.0 * STRIDE
        qb[base + 1] = 2.0 * STRIDE
        qc[base + 0] = -0.5 * STRIDE
        qc[base + 1] = -0.5 * STRIDE
        xm[base + 0] = STRIDE
        ym[base + 1] = STRIDE
        # wh: (s*2)^2 * anchor = 4*anchor*s^2
        qa[base + 2] = 4.0 * anchors_px[a, 0]
        qa[base + 3] = 4.0 * anchors_px[a, 1]
        # obj / cls: passthrough sigmoid
        for c in range(4, NO):
            qb[base + c] = 1.0
    # padded channels 27..31 of each block stay all-zero -> output 0, sliced away.

    # All seven tiny constants packed into ONE (8, 128) table (single DMA).
    tbl = np.zeros((8, LANES), np.float32)
    tbl[0] = np.tile(bd_p, GRP)
    tbl[1] = np.tile(qa, GRP)
    tbl[2] = np.tile(qb, GRP)
    tbl[3] = np.tile(qc, GRP)
    tbl[4] = np.tile(xm, GRP)
    tbl[5] = np.tile(ym, GRP)

    # Dense tables only used by the pure-JAX reference (original formulation).
    ys, xs = np.meshgrid(np.arange(H), np.arange(W), indexing="ij")
    gx = np.tile(xs.reshape(-1).astype(np.float32), B)
    gy = np.tile(ys.reshape(-1).astype(np.float32), B)
    grid_full = np.zeros((N, A), np.float32)
    anchor_full = np.ones((1, A), np.float32)
    mode = np.full((1, A), 2, np.int32)
    for a in range(NA):
        grid_full[:, a * NO + 0] = gx
        grid_full[:, a * NO + 1] = gy
        anchor_full[0, a * NO + 2] = anchors_px[a, 0]
        anchor_full[0, a * NO + 3] = anchors_px[a, 1]
        mode[0, a * NO + 0] = 0
        mode[0, a * NO + 1] = 0
        mode[0, a * NO + 2] = 1
        mode[0, a * NO + 3] = 1

    return dict(
        # kernel params
        wc_block=jnp.asarray(wc_block), wd_block=jnp.asarray(wd_block),
        tbl=jnp.asarray(tbl),
        # reference-only params
        w_conv=w_conv, b_conv=b_conv, w_det=w_det, b_det=b_det,
        grid_full=jnp.asarray(grid_full),
        anchor_full=jnp.asarray(anchor_full),
        mode=jnp.asarray(mode))


# ---------------------------- im2col (wrapper-side glue) ----------------------------
def _im2col_patches(im):
    """NCHW (B,CIN,H,W) -> (N/4, 128) lane-dense im2col patches for a 3x3 'same'
    conv.  Per 32-block: cols 0..26 = taps, col 27 = 1.0 (folded conv bias),
    cols 28..31 = 0.  Four consecutive spatial rows are packed per output row."""
    x = jnp.transpose(im, (0, 2, 3, 1)).astype(jnp.float32)           # NCHW -> NHWC
    b, h, w, _ = x.shape
    xp = jnp.pad(x, ((0, 0), (1, 1), (1, 1), (0, 0)))
    taps = [xp[:, kh:kh + h, kw:kw + w, :] for kh in range(3) for kw in range(3)]
    ones = jnp.ones((b, h, w, 1), jnp.float32)                        # bias column (idx 27)
    zeros = jnp.zeros((b, h, w, KP - K9 - 1), jnp.float32)
    patches = jnp.concatenate(taps + [ones, zeros], axis=-1)          # (b,h,w,32)
    return patches.reshape(b * h * w // GRP, LANES)                   # (N/4, 128)


# ---------------------------- DetectMultiBackend.forward ----------------------------
def detect_multibackend_forward(im, params, val=False):
    """im: (B, C, H, W) float32, NCHW like the PyTorch module.  Returns
    y: (B, NA*H*W, NO) detections (or (y, []) when val=True), matching
    `return (y, []) if val else y`."""
    b, ch, h, w = im.shape
    patches = _im2col_patches(im)                                      # (N/4, 128)
    preds = _fused_detect(patches, params)                             # (N/4, 128)
    preds = preds.reshape(b * h * w, AP)[:, :A]                        # (N, 27)
    # (N, NA*NO) -> (B, NA, H, W, NO) -> (B, NA*H*W, NO), same as Detect.view/permute
    y = preds.reshape(b, h, w, NA, NO).transpose(0, 3, 1, 2, 4).reshape(b, NA * h * w, NO)
    return (y, []) if val else y


# ---------------------------- pure-JAX reference (for validation) ----------------------------
def ref_forward(im, params):
    x = jnp.transpose(im, (0, 2, 3, 1)).astype(jnp.float32)
    b, h, w, cin = x.shape
    xp = jnp.pad(x, ((0, 0), (1, 1), (1, 1), (0, 0)))
    cout = params["w_conv"].shape[1]
    acc = jnp.zeros((b, h, w, cout), jnp.float32)
    for kh in range(3):
        for kw in range(3):
            for ci in range(cin):
                row = (kh * 3 + kw) * cin + ci
                acc = acc + xp[:, kh:kh + h, kw:kw + w, ci:ci + 1] * params["w_conv"][row][None, :]
    acc = acc + params["b_conv"]
    feat = acc * jax.nn.sigmoid(acc)
    z = feat.reshape(b * h * w, cout) @ params["w_det"] + params["b_det"]
    s = jax.nn.sigmoid(z)
    xy = (s * 2.0 - 0.5 + params["grid_full"]) * STRIDE
    wh = (s * 2.0) ** 2 * params["anchor_full"]
    out = jnp.where(params["mode"] == 0, xy, jnp.where(params["mode"] == 1, wh, s))
    return out.reshape(b, h, w, NA, NO).transpose(0, 3, 1, 2, 4).reshape(b, NA * h * w, NO)


if __name__ == "__main__":
    key = jax.random.PRNGKey(0)
    k_im, k_p = jax.random.split(key)
    im = jax.random.normal(k_im, (B, CIN, H, W), jnp.float32)
    params = make_params(k_p)

    y = detect_multibackend_forward(im, params)
    y = jax.block_until_ready(y)

    y_ref = jax.block_until_ready(ref_forward(im, params))
    assert y.shape == (B, NA * H * W, NO), y.shape
    assert np.allclose(np.asarray(y), np.asarray(y_ref), atol=1e-4, rtol=1e-4), \
        float(np.max(np.abs(np.asarray(y) - np.asarray(y_ref))))
    print("KERNEL_OK")
</pallas_src>

<mosaic_0001>
module attributes {stable_mosaic.version = 11 : i64} {
  func.func @_fused_kernel(%arg0: i32, %arg1: memref<128x128xf32, #tpu.memory_space<vmem>>, %arg2: memref<128x128xf32, #tpu.memory_space<vmem>>, %arg3: memref<128x128xf32, #tpu.memory_space<vmem>>, %arg4: memref<8x128xf32, #tpu.memory_space<vmem>>, %arg5: memref<128x128xf32, #tpu.memory_space<vmem>>) attributes {dimension_semantics = [#tpu.dimension_semantics<parallel>], iteration_bounds = array<i64: 1>, scalar_prefetch = 0 : i64, scratch_operands = 0 : i64, tpu.core_type = #tpu.core_type<tc>, window_params = [{transform_indices = @transform_0, window_bounds = array<i64: 128, 128>}, {pipeline_mode = #tpu.pipeline_mode<synchronous>, transform_indices = @transform_1, window_bounds = array<i64: 128, 128>}, {pipeline_mode = #tpu.pipeline_mode<synchronous>, transform_indices = @transform_2, window_bounds = array<i64: 128, 128>}, {pipeline_mode = #tpu.pipeline_mode<synchronous>, transform_indices = @transform_3, window_bounds = array<i64: 8, 128>}, {transform_indices = @transform_4, window_bounds = array<i64: 128, 128>}]} {
    %c128_i32 = arith.constant 128 : i32
    %0 = arith.muli %arg0, %c128_i32 : i32
    %1 = tpu.iota {dimensions = array<i32: 0>} : vector<128x128xi32>
    %2 = vector.broadcast %0 : i32 to vector<128x128xi32>
    %3 = arith.addi %2, %1 : vector<128x128xi32>
    %4 = tpu.iota {dimensions = array<i32: 1>} : vector<128x128xi32>
    %c5_i32 = arith.constant 5 : i32
    %5 = vector.broadcast %c5_i32 : i32 to vector<128x128xi32>
    %6 = arith.shrsi %4, %5 : vector<128x128xi32>
    %c2_i32 = arith.constant 2 : i32
    %7 = vector.broadcast %c2_i32 : i32 to vector<128x128xi32>
    %8 = arith.shli %3, %7 : vector<128x128xi32>
    %9 = arith.ori %8, %6 : vector<128x128xi32>
    %c15_i32 = arith.constant 15 : i32
    %10 = vector.broadcast %c15_i32 : i32 to vector<128x128xi32>
    %11 = arith.andi %9, %10 : vector<128x128xi32>
    %12 = arith.sitofp %11 : vector<128x128xi32> to vector<128x128xf32>
    %c4_i32 = arith.constant 4 : i32
    %13 = vector.broadcast %c4_i32 : i32 to vector<128x128xi32>
    %14 = arith.shrsi %9, %13 : vector<128x128xi32>
    %c15_i32_0 = arith.constant 15 : i32
    %15 = vector.broadcast %c15_i32_0 : i32 to vector<128x128xi32>
    %16 = arith.andi %14, %15 : vector<128x128xi32>
    %17 = arith.sitofp %16 : vector<128x128xi32> to vector<128x128xf32>
    %c3 = arith.constant 3 : index
    %c0 = arith.constant 0 : index
    %18 = vector.load %arg4[%c3, %c0] : memref<8x128xf32, #tpu.memory_space<vmem>>, vector<1x128xf32>
    %c4 = arith.constant 4 : index
    %c0_1 = arith.constant 0 : index
    %19 = vector.load %arg4[%c4, %c0_1] : memref<8x128xf32, #tpu.memory_space<vmem>>, vector<1x128xf32>
    %20 = vector.broadcast %19 : vector<1x128xf32> to vector<128x128xf32>
    %21 = arith.mulf %12, %20 : vector<128x128xf32>
    %22 = vector.broadcast %18 : vector<1x128xf32> to vector<128x128xf32>
    %23 = arith.addf %22, %21 : vector<128x128xf32>
    %c5 = arith.constant 5 : index
    %c0_2 = arith.constant 0 : index
    %24 = vector.load %arg4[%c5, %c0_2] : memref<8x128xf32, #tpu.memory_space<vmem>>, vector<1x128xf32>
    %25 = vector.broadcast %24 : vector<1x128xf32> to vector<128x128xf32>
    %26 = arith.mulf %17, %25 : vector<128x128xf32>
    %27 = arith.addf %23, %26 : vector<128x128xf32>
    %c0_3 = arith.constant 0 : index
    %c0_4 = arith.constant 0 : index
    %28 = vector.load %arg1[%c0_3, %c0_4] : memref<128x128xf32, #tpu.memory_space<vmem>>, vector<128x128xf32>
    %c0_5 = arith.constant 0 : index
    %c0_6 = arith.constant 0 : index
    %29 = vector.load %arg2[%c0_5, %c0_6] : memref<128x128xf32, #tpu.memory_space<vmem>>, vector<128x128xf32>
    %cst = arith.constant dense<0.000000e+00> : vector<128x128xf32>
    %30 = tpu.matmul %28, %29, %cst {dimension_numbers = #tpu.dot_dimension_numbers<[1], [0], [0], [1], [0, 0, 1, 1], [], []>} : vector<128x128xf32>, vector<128x128xf32>, vector<128x128xf32> -> vector<128x128xf32>
    %31 = arith.negf %30 : vector<128x128xf32>
    %32 = math.exp %31 : vector<128x128xf32>
    %cst_7 = arith.constant 1.000000e+00 : f32
    %33 = vector.broadcast %cst_7 : f32 to vector<128x128xf32>
    %34 = arith.addf %33, %32 : vector<128x128xf32>
    %35 = arith.divf %33, %34 : vector<128x128xf32>
    %36 = arith.mulf %30, %35 : vector<128x128xf32>
    %c0_8 = arith.constant 0 : index
    %c0_9 = arith.constant 0 : index
    %37 = vector.load %arg3[%c0_8, %c0_9] : memref<128x128xf32, #tpu.memory_space<vmem>>, vector<128x128xf32>
    %cst_10 = arith.constant dense<0.000000e+00> : vector<128x128xf32>
    %38 = tpu.matmul %36, %37, %cst_10 {dimension_numbers = #tpu.dot_dimension_numbers<[1], [0], [0], [1], [0, 0, 1, 1], [], []>} : vector<128x128xf32>, vector<128x128xf32>, vector<128x128xf32> -> vector<128x128xf32>
    %c0_11 = arith.constant 0 : index
    %c0_12 = arith.constant 0 : index
    %39 = vector.load %arg4[%c0_11, %c0_12] : memref<8x128xf32, #tpu.memory_space<vmem>>, vector<1x128xf32>
    %40 = vector.broadcast %39 : vector<1x128xf32> to vector<128x128xf32>
    %41 = arith.addf %38, %40 : vector<128x128xf32>
    %42 = arith.negf %41 : vector<128x128xf32>
    %43 = math.exp %42 : vector<128x128xf32>
    %cst_13 = arith.constant 1.000000e+00 : f32
    %44 = vector.broadcast %cst_13 : f32 to vector<128x128xf32>
    %45 = arith.addf %44, %43 : vector<128x128xf32>
    %46 = arith.divf %44, %45 : vector<128x128xf32>
    %c1 = arith.constant 1 : index
    %c0_14 = arith.constant 0 : index
    %47 = vector.load %arg4[%c1, %c0_14] : memref<8x128xf32, #tpu.memory_space<vmem>>, vector<1x128xf32>
    %48 = vector.broadcast %47 : vector<1x128xf32> to vector<128x128xf32>
    %49 = arith.mulf %46, %48 : vector<128x128xf32>
    %c2 = arith.constant 2 : index
    %c0_15 = arith.constant 0 : index
    %50 = vector.load %arg4[%c2, %c0_15] : memref<8x128xf32, #tpu.memory_space<vmem>>, vector<1x128xf32>
    %51 = vector.broadcast %50 : vector<1x128xf32> to vector<128x128xf32>
    %52 = arith.addf %49, %51 : vector<128x128xf32>
    %53 = arith.mulf %46, %52 : vector<128x128xf32>
    %54 = arith.addf %53, %27 : vector<128x128xf32>
    %c0_16 = arith.constant 0 : index
    %c0_17 = arith.constant 0 : index
    %55 = vector.load %arg5[%c0_16, %c0_17] : memref<128x128xf32, #tpu.memory_space<vmem>>, vector<128x128xf32>
    tpu.vector_store %arg5[%c0_16, %c0_17], %54 {strides = array<i32>} : memref<128x128xf32, #tpu.memory_space<vmem>>, vector<128x128xf32>,
    return
  }
  func.func @transform_0(%arg0: i32) -> (i32, i32) {
    %c0_i32 = arith.constant 0 : i32
    %c0_i32_0 = arith.constant 0 : i32
    return %arg0, %c0_i32 : i32, i32
  }
  func.func @transform_1(%arg0: i32) -> (i32, i32) {
    %c0_i32 = arith.constant 0 : i32
    %c0_i32_0 = arith.constant 0 : i32
    %c0_i32_1 = arith.constant 0 : i32
    return %c0_i32, %c0_i32_0 : i32, i32
  }
  func.func @transform_2(%arg0: i32) -> (i32, i32) {
    %c0_i32 = arith.constant 0 : i32
    %c0_i32_0 = arith.constant 0 : i32
    %c0_i32_1 = arith.constant 0 : i32
    return %c0_i32, %c0_i32_0 : i32, i32
  }
  func.func @transform_3(%arg0: i32) -> (i32, i32) {
    %c0_i32 = arith.constant 0 : i32
    %c0_i32_0 = arith.constant 0 : i32
    %c0_i32_1 = arith.constant 0 : i32
    return %c0_i32, %c0_i32_0 : i32, i32
  }
  func.func @transform_4(%arg0: i32) -> (i32, i32) {
    %c0_i32 = arith.constant 0 : i32
    %c0_i32_0 = arith.constant 0 : i32
    return %arg0, %c0_i32 : i32, i32
  }
}

</mosaic_0001>

<llo_original>
// kernel: tpu_custom_call.1
$region0: #{tpu_custom_call.1}
  #allocation0 [shape = 'u32[]', space=smem, size = 0x4, offset = 0x4, fixed_abs, tag = 'smem constant byte address 0x4 - core index']
  #allocation1 [shape = 'u32[144,128]{1,0:T(1,128)}', space=vmem, size = 0x12000, scoped, tag = 'internal scratch']
  %s0 = inlined_call_operand.hbm [shape: f32[128,128], index: 0, kind: input, shape index: {}]
  %s1 = inlined_call_operand.hbm [shape: f32[128,128], index: 1, kind: input, shape index: {}]
  %s2 = inlined_call_operand.hbm [shape: f32[128,128], index: 2, kind: input, shape index: {}]
  %s3 = inlined_call_operand.hbm [shape: f32[8,128], index: 3, kind: input, shape index: {}]
  %s4 = inlined_call_operand.hbm [shape: f32[128,128], index: 4, kind: output, shape index: {}]
  %s5 = sld [smem:[#allocation0]]
  $region42: #{tpu_custom_call.1} parent=0
    _
  %s7 = ssub.s32 1, %s5
  %s8 = scalar_select 0, %s7, %s5
  $region1: #{tpu_custom_call.1} parent=0
    #allocation2 [shape = 'u8[65536]{0}', space=vmem, size = 0x10000, scoped, tag = 'input window, operand 0, single buffered']
    #allocation3 [shape = 's32[1]{0}', space=sflag, size = 0x4, scoped, tag = 'scoped memory for tpu_custom_call.1']
    #allocation4 [shape = 's32[1]{0}', space=sflag, size = 0x4, scoped, tag = 'scoped memory for tpu_custom_call.1']
    #allocation5 [shape = 'u8[65536]{0}', space=vmem, size = 0x10000, scoped, tag = 'input window, operand 1, single buffered']
    #allocation6 [shape = 's32[1]{0}', space=sflag, size = 0x4, scoped, tag = 'scoped memory for tpu_custom_call.1']
    #allocation7 [shape = 'u8[65536]{0}', space=vmem, size = 0x10000, scoped, tag = 'input window, operand 2, single buffered']
    #allocation8 [shape = 'u8[4096]{0}', space=vmem, size = 0x1000, scoped, tag = 'input window, operand 3, single buffered']
    #allocation9 [shape = 's32[1]{0}', space=sflag, size = 0x4, scoped, tag = 'scoped memory for tpu_custom_call.1']
    #allocation10 [shape = 'u8[65536]{0}', space=vmem, size = 0x10000, scoped, tag = 'output window, operand 0, single buffered']
    %9 = vsyncpa [#allocation3], 0
    %10 = vsyncpa [#allocation6], 0
    %11 = vsyncpa [#allocation9], 0
    %12 = vsyncpa [#allocation4], 0
    // Predicated region
    $region2: #{tpu_custom_call.1} parent=1 // pred_check
      _
    $region3: #{tpu_custom_call.1} parent=1 // pred_check_branch
      %14 = sbr.rel (0) target = $region5
    $region4: #{tpu_custom_call.1} parent=1 // pred_region
      %s16 = ssub.s32 2048, 2048
      %17 = vsyncadd [#allocation3], %s16
      %s18 = sshll.u32 [#allocation2], 4
      %s19 = int_to_ptr.vmem [resolvable:$true] %s18
      %24 = dma.hbm_to_vmem [thread:$0]  %s0, 2048, %s19, [#allocation3], 128, 128, 8
    $region5: #{tpu_custom_call.1} parent=1 // pred_fallthru
      _
    // Predicated region
    $region6: #{tpu_custom_call.1} parent=1 // pred_check
      _
    $region7: #{tpu_custom_call.1} parent=1 // pred_check_branch
      %26 = sbr.rel (0) target = $region9
    $region8: #{tpu_custom_call.1} parent=1 // pred_region
      %s28 = ssub.s32 2048, 2048
      %29 = vsyncadd [#allocation6], %s28
      %s30 = sshll.u32 [#allocation5], 4
      %s31 = int_to_ptr.vmem [resolvable:$true] %s30
      %36 = dma.hbm_to_vmem [thread:$0]  %s1, 2048, %s31, [#allocation6], 128, 128, 8
    $region9: #{tpu_custom_call.1} parent=1 // pred_fallthru
      _
    // Predicated region
    $region10: #{tpu_custom_call.1} parent=1 // pred_check
      _
    $region11: #{tpu_custom_call.1} parent=1 // pred_check_branch
      %38 = sbr.rel (0) target = $region13
    $region12: #{tpu_custom_call.1} parent=1 // pred_region
      %s40 = ssub.s32 2048, 2048
      %41 = vsyncadd [#allocation6], %s40
      %s42 = sshll.u32 [#allocation7], 4
      %s43 = int_to_ptr.vmem [resolvable:$true] %s42
      %48 = dma.hbm_to_vmem [thread:$0]  %s2, 2048, %s43, [#allocation6], 128, 128, 8
    $region13: #{tpu_custom_call.1} parent=1 // pred_fallthru
      _
    // Predicated region
    $region14: #{tpu_custom_call.1} parent=1 // pred_check
      _
    $region15: #{tpu_custom_call.1} parent=1 // pred_check_branch
      %50 = sbr.rel (0) target = $region17
    $region16: #{tpu_custom_call.1} parent=1 // pred_region
      %s52 = ssub.s32 128, 128
      %53 = vsyncadd [#allocation9], %s52
      %s55 = sshll.u32 [#allocation8], 4
      %s56 = int_to_ptr.vmem [resolvable:$true] %s55
      %58 = dma.hbm_to_vmem [thread:$0]  %s3, 128, %s56, [#allocation9]
    $region17: #{tpu_custom_call.1} parent=1 // pred_fallthru
      _
    // Predicated region
    $region18: #{tpu_custom_call.1} parent=1 // pred_check
      _
    $region19: #{tpu_custom_call.1} parent=1 // pred_check_branch
      %60 = sbr.rel (0) target = $region21
    $region20: #{tpu_custom_call.1} parent=1 // pred_region
      %61 = dma.done [#allocation3], 2048
    $region21: #{tpu_custom_call.1} parent=1 // pred_fallthru
      _
    // Predicated region
    $region22: #{tpu_custom_call.1} parent=1 // pred_check
      _
    $region23: #{tpu_custom_call.1} parent=1 // pred_check_branch
      %63 = sbr.rel (0) target = $region25
    $region24: #{tpu_custom_call.1} parent=1 // pred_region
      %64 = dma.done [#allocation6], 2048
    $region25: #{tpu_custom_call.1} parent=1 // pred_fallthru
      _
    // Predicated region
    $region26: #{tpu_custom_call.1} parent=1 // pred_check
      _
    $region27: #{tpu_custom_call.1} parent=1 // pred_check_branch
      %66 = sbr.rel (0) target = $region29
    $region28: #{tpu_custom_call.1} parent=1 // pred_region
      %67 = dma.done [#allocation6], 2048
    $region29: #{tpu_custom_call.1} parent=1 // pred_fallthru
      _
    // Predicated region
    $region30: #{tpu_custom_call.1} parent=1 // pred_check
      _
    $region31: #{tpu_custom_call.1} parent=1 // pred_check_branch
      %69 = sbr.rel (0) target = $region33
    $region32: #{tpu_custom_call.1} parent=1 // pred_region
      %70 = dma.done [#allocation9], 128
    $region33: #{tpu_custom_call.1} parent=1 // pred_fallthru
      _
    %s71 = smul.u32 0, 128
    %v72 = vlaneseq
    %v73 = vshrl.u32 %v72, 7
    %v74 = vadd.s32 %v73, 8
    %v75 = vadd.s32 %v73, 16
    %v76 = vadd.s32 %v73, 24
    %v77 = vadd.s32 %v73, 32
    %v78 = vadd.s32 %v73, 40
    %v79 = vadd.s32 %v73, 48
    %v80 = vadd.s32 %v73, 56
    %v81 = vadd.s32 %v73, 64
    %v82 = vadd.s32 %v73, 72
    %v83 = vadd.s32 %v73, 80
    %v84 = vadd.s32 %v73, 88
    %v85 = vadd.s32 %v73, 96
    %v86 = vadd.s32 %v73, 104
    %v87 = vadd.s32 %v73, 112
    %v88 = vadd.s32 %v73, 120
    %v89 = vstv %s71
    %v90 = vadd.s32 %v89, %v73
    %v91 = vadd.s32 %v89, %v74
    %v92 = vadd.s32 %v89, %v75
    %v93 = vadd.s32 %v89, %v76
    %v94 = vadd.s32 %v89, %v77
    %v95 = vadd.s32 %v89, %v78
    %v96 = vadd.s32 %v89, %v79
    %v97 = vadd.s32 %v89, %v80
    %v98 = vadd.s32 %v89, %v81
    %v99 = vadd.s32 %v89, %v82
    %v100 = vadd.s32 %v89, %v83
    %v101 = vadd.s32 %v89, %v84
    %v102 = vadd.s32 %v89, %v85
    %v103 = vadd.s32 %v89, %v86
    %v104 = vadd.s32 %v89, %v87
    %v105 = vadd.s32 %v89, %v88
    %v106 = vlaneseq
    %v107 = vand.u32 %v106, 127
    %v108 = vshra.s32 %v107, 5
    %v109 = vshll.u32 %v90, 2
    %v110 = vshll.u32 %v91, 2
    %v111 = vshll.u32 %v92, 2
    %v112 = vshll.u32 %v93, 2
    %v113 = vshll.u32 %v94, 2
    %v114 = vshll.u32 %v95, 2
    %v115 = vshll.u32 %v96, 2
    %v116 = vshll.u32 %v97, 2
    %v117 = vshll.u32 %v98, 2
    %v118 = vshll.u32 %v99, 2
    %v119 = vshll.u32 %v100, 2
    %v120 = vshll.u32 %v101, 2
    %v121 = vshll.u32 %v102, 2
    %v122 = vshll.u32 %v103, 2
    %v123 = vshll.u32 %v104, 2
    %v124 = vshll.u32 %v105, 2
    %v125 = vor.u32 %v109, %v108
    %v126 = vor.u32 %v110, %v108
    %v127 = vor.u32 %v111, %v108
    %v128 = vor.u32 %v112, %v108
    %v129 = vor.u32 %v113, %v108
    %v130 = vor.u32 %v114, %v108
    %v131 = vor.u32 %v115, %v108
    %v132 = vor.u32 %v116, %v108
    %v133 = vor.u32 %v117, %v108
    %v134 = vor.u32 %v118, %v108
    %v135 = vor.u32 %v119, %v108
    %v136 = vor.u32 %v120, %v108
    %v137 = vor.u32 %v121, %v108
    %v138 = vor.u32 %v122, %v108
    %v139 = vor.u32 %v123, %v108
    %v140 = vor.u32 %v124, %v108
    %v141 = vand.u32 %v125, 15
    %v142 = vand.u32 %v126, 15
    %v143 = vand.u32 %v127, 15
    %v144 = vand.u32 %v128, 15
    %v145 = vand.u32 %v129, 15
    %v146 = vand.u32 %v130, 15
    %v147 = vand.u32 %v131, 15
    %v148 = vand.u32 %v132, 15
    %v149 = vand.u32 %v133, 15
    %v150 = vand.u32 %v134, 15
    %v151 = vand.u32 %v135, 15
    %v152 = vand.u32 %v136, 15
    %v153 = vand.u32 %v137, 15
    %v154 = vand.u32 %v138, 15
    %v155 = vand.u32 %v139, 15
    %v156 = vand.u32 %v140, 15
    %v157 = vcvt.s32.f32 %v141
    %v158 = vcvt.s32.f32 %v142
    %v159 = vcvt.s32.f32 %v143
    %v160 = vcvt.s32.f32 %v144
    %v161 = vcvt.s32.f32 %v145
    %v162 = vcvt.s32.f32 %v146
    %v163 = vcvt.s32.f32 %v147
    %v164 = vcvt.s32.f32 %v148
    %v165 = vcvt.s32.f32 %v149
    %v166 = vcvt.s32.f32 %v150
    %v167 = vcvt.s32.f32 %v151
    %v168 = vcvt.s32.f32 %v152
    %v169 = vcvt.s32.f32 %v153
    %v170 = vcvt.s32.f32 %v154
    %v171 = vcvt.s32.f32 %v155
    %v172 = vcvt.s32.f32 %v156
    %v173 = vshra.s32 %v125, 4
    %v174 = vshra.s32 %v126, 4
    %v175 = vshra.s32 %v127, 4
    %v176 = vshra.s32 %v128, 4
    %v177 = vshra.s32 %v129, 4
    %v178 = vshra.s32 %v130, 4
    %v179 = vshra.s32 %v131, 4
    %v180 = vshra.s32 %v132, 4
    %v181 = vshra.s32 %v133, 4
    %v182 = vshra.s32 %v134, 4
    %v183 = vshra.s32 %v135, 4
    %v184 = vshra.s32 %v136, 4
    %v185 = vshra.s32 %v137, 4
    %v186 = vshra.s32 %v138, 4
    %v187 = vshra.s32 %v139, 4
    %v188 = vshra.s32 %v140, 4
    %v189 = vand.u32 %v173, 15
    %v190 = vand.u32 %v174, 15
    %v191 = vand.u32 %v175, 15
    %v192 = vand.u32 %v176, 15
    %v193 = vand.u32 %v177, 15
    %v194 = vand.u32 %v178, 15
    %v195 = vand.u32 %v179, 15
    %v196 = vand.u32 %v180, 15
    %v197 = vand.u32 %v181, 15
    %v198 = vand.u32 %v182, 15
    %v199 = vand.u32 %v183, 15
    %v200 = vand.u32 %v184, 15
    %v201 = vand.u32 %v185, 15
    %v202 = vand.u32 %v186, 15
    %v203 = vand.u32 %v187, 15
    %v204 = vand.u32 %v188, 15
    %v205 = vcvt.s32.f32 %v189
    %v206 = vcvt.s32.f32 %v190
    %v207 = vcvt.s32.f32 %v191
    %v208 = vcvt.s32.f32 %v192
    %v209 = vcvt.s32.f32 %v193
    %v210 = vcvt.s32.f32 %v194
    %v211 = vcvt.s32.f32 %v195
    %v212 = vcvt.s32.f32 %v196
    %v213 = vcvt.s32.f32 %v197
    %v214 = vcvt.s32.f32 %v198
    %v215 = vcvt.s32.f32 %v199
    %v216 = vcvt.s32.f32 %v200
    %v217 = vcvt.s32.f32 %v201
    %v218 = vcvt.s32.f32 %v202
    %v219 = vcvt.s32.f32 %v203
    %v220 = vcvt.s32.f32 %v204
    %v221 = vld [vmem:[#allocation8 + $0x3] sm:$0x1]
    %v222 = vld [vmem:[#allocation8 + $0x4] sm:$0x1]
    %v223 = vlaneseq
    %v224 = vshrl.u32 %v223, 7
    %v225 = vsub.s32 0, %v224
    %v226 = vrot.slane %v222, %v225
    %v227 = vmul.f32 %v157, %v226
    %v228 = vmul.f32 %v158, %v226
    %v229 = vmul.f32 %v159, %v226
    %v230 = vmul.f32 %v160, %v226
    %v231 = vmul.f32 %v161, %v226
    %v232 = vmul.f32 %v162, %v226
    %v233 = vmul.f32 %v163, %v226
    %v234 = vmul.f32 %v164, %v226
    %v235 = vmul.f32 %v165, %v226
    %v236 = vmul.f32 %v166, %v226
    %v237 = vmul.f32 %v167, %v226
    %v238 = vmul.f32 %v168, %v226
    %v239 = vmul.f32 %v169, %v226
    %v240 = vmul.f32 %v170, %v226
    %v241 = vmul.f32 %v171, %v226
    %v242 = vmul.f32 %v172, %v226
    %v243 = vlaneseq
    %v244 = vshrl.u32 %v243, 7
    %v245 = vsub.s32 0, %v244
    %v246 = vrot.slane %v221, %v245
    %v247 = vadd.f32 %v246, %v227
    %v248 = vadd.f32 %v246, %v228
    %v249 = vadd.f32 %v246, %v229
    %v250 = vadd.f32 %v246, %v230
    %v251 = vadd.f32 %v246, %v231
    %v252 = vadd.f32 %v246, %v232
    %v253 = vadd.f32 %v246, %v233
    %v254 = vadd.f32 %v246, %v234
    %v255 = vadd.f32 %v246, %v235
    %v256 = vadd.f32 %v246, %v236
    %v257 = vadd.f32 %v246, %v237
    %v258 = vadd.f32 %v246, %v238
    %v259 = vadd.f32 %v246, %v239
    %v260 = vadd.f32 %v246, %v240
    %v261 = vadd.f32 %v246, %v241
    %v262 = vadd.f32 %v246, %v242
    %v263 = vld [vmem:[#allocation8 + $0x5] sm:$0x1]
    %v264 = vlaneseq
    %v265 = vshrl.u32 %v264, 7
    %v266 = vsub.s32 0, %v265
    %v267 = vrot.slane %v263, %v266
    %v268 = vmul.f32 %v205, %v267
    %v269 = vmul.f32 %v206, %v267
    %v270 = vmul.f32 %v207, %v267
    %v271 = vmul.f32 %v208, %v267
    %v272 = vmul.f32 %v209, %v267
    %v273 = vmul.f32 %v210, %v267
    %v274 = vmul.f32 %v211, %v267
    %v275 = vmul.f32 %v212, %v267
    %v276 = vmul.f32 %v213, %v267
    %v277 = vmul.f32 %v214, %v267
    %v278 = vmul.f32 %v215, %v267
    %v279 = vmul.f32 %v216, %v267
    %v280 = vmul.f32 %v217, %v267
    %v281 = vmul.f32 %v218, %v267
    %v282 = vmul.f32 %v219, %v267
    %v283 = vmul.f32 %v220, %v267
    %v284 = vadd.f32 %v247, %v268
    %v285 = vadd.f32 %v248, %v269
    %v286 = vadd.f32 %v249, %v270
    %v287 = vadd.f32 %v250, %v271
    %v288 = vadd.f32 %v251, %v272
    %v289 = vadd.f32 %v252, %v273
    %v290 = vadd.f32 %v253, %v274
    %v291 = vadd.f32 %v254, %v275
    %v292 = vadd.f32 %v255, %v276
    %v293 = vadd.f32 %v256, %v277
    %v294 = vadd.f32 %v257, %v278
    %v295 = vadd.f32 %v258, %v279
    %v296 = vadd.f32 %v259, %v280
    %v297 = vadd.f32 %v260, %v281
    %v298 = vadd.f32 %v261, %v282
    %v299 = vadd.f32 %v262, %v283
    %v300 = vld [vmem:[#allocation2] sm:$0xff]
    %v301 = vld [vmem:[#allocation2 + $0x8] sm:$0xff]
    %v302 = vld [vmem:[#allocation2 + $0x10] sm:$0xff]
    %v303 = vld [vmem:[#allocation2 + $0x18] sm:$0xff]
    %v304 = vld [vmem:[#allocation2 + $0x20] sm:$0xff]
    %v305 = vld [vmem:[#allocation2 + $0x28] sm:$0xff]
    %v306 = vld [vmem:[#allocation2 + $0x30] sm:$0xff]
    %v307 = vld [vmem:[#allocation2 + $0x38] sm:$0xff]
    %v308 = vld [vmem:[#allocation2 + $0x40] sm:$0xff]
    %v309 = vld [vmem:[#allocation2 + $0x48] sm:$0xff]
    %v310 = vld [vmem:[#allocation2 + $0x50] sm:$0xff]
    %v311 = vld [vmem:[#allocation2 + $0x58] sm:$0xff]
    %v312 = vld [vmem:[#allocation2 + $0x60] sm:$0xff]
    %v313 = vld [vmem:[#allocation2 + $0x68] sm:$0xff]
    %v314 = vld [vmem:[#allocation2 + $0x70] sm:$0xff]
    %v315 = vld [vmem:[#allocation2 + $0x78] sm:$0xff]
    %v316 = vld [vmem:[#allocation5] sm:$0xff]
    %v317 = vld [vmem:[#allocation5 + $0x8] sm:$0xff]
    %v318 = vld [vmem:[#allocation5 + $0x10] sm:$0xff]
    %v319 = vld [vmem:[#allocation5 + $0x18] sm:$0xff]
    %v320 = vld [vmem:[#allocation5 + $0x20] sm:$0xff]
    %v321 = vld [vmem:[#allocation5 + $0x28] sm:$0xff]
    %v322 = vld [vmem:[#allocation5 + $0x30] sm:$0xff]
    %v323 = vld [vmem:[#allocation5 + $0x38] sm:$0xff]
    %v324 = vld [vmem:[#allocation5 + $0x40] sm:$0xff]
    %v325 = vld [vmem:[#allocation5 + $0x48] sm:$0xff]
    %v326 = vld [vmem:[#allocation5 + $0x50] sm:$0xff]
    %v327 = vld [vmem:[#allocation5 + $0x58] sm:$0xff]
    %v328 = vld [vmem:[#allocation5 + $0x60] sm:$0xff]
    %v329 = vld [vmem:[#allocation5 + $0x68] sm:$0xff]
    %v330 = vld [vmem:[#allocation5 + $0x70] sm:$0xff]
    %v331 = vld [vmem:[#allocation5 + $0x78] sm:$0xff]
    %332 = vmatprep.subr.mxu0 0.0
    %333 = vmatpush1.msra.mxu0 %v331
    %334 = vmatprep.subr.mxu0 0.0
    %335 = vmatpush1.msra.mxu0 %v330
    %336 = vmatprep.subr.mxu0 0.0
    %337 = vmatpush1.msra.mxu0 %v329
    %338 = vmatprep.subr.mxu0 0.0
    %339 = vmatpush1.msra.mxu0 %v328
    %340 = vmatprep.subr.mxu0 0.0
    %341 = vmatpush1.msra.mxu0 %v327
    %342 = vmatprep.subr.mxu0 0.0
    %343 = vmatpush1.msra.mxu0 %v326
    %344 = vmatprep.subr.mxu0 0.0
    %345 = vmatpush1.msra.mxu0 %v325
    %346 = vmatprep.subr.mxu0 0.0
    %347 = vmatpush1.msra.mxu0 %v324
    %348 = vmatprep.subr.mxu0 0.0
    %349 = vmatpush1.msra.mxu0 %v323
    %350 = vmatprep.subr.mxu0 0.0
    %351 = vmatpush1.msra.mxu0 %v322
    %352 = vmatprep.subr.mxu0 0.0
    %353 = vmatpush1.msra.mxu0 %v321
    %354 = vmatprep.subr.mxu0 0.0
    %355 = vmatpush1.msra.mxu0 %v320
    %356 = vmatprep.subr.mxu0 0.0
    %357 = vmatpush1.msra.mxu0 %v319
    %358 = vmatprep.subr.mxu0 0.0
    %359 = vmatpush1.msra.mxu0 %v318
    %360 = vmatprep.subr.mxu0 0.0
    %361 = vmatpush1.msra.mxu0 %v317
    %362 = vmatprep.subr.mxu0 0.0
    %363 = vmatpush1.msra.mxu0 %v316
    %364 = vmatprep.subr.mxu0 0.0
    %365 = vmatpush2.msra.mxu0 0.0
    %366 = vmatprep.subr.mxu0 0.0
    %367 = vmatpush2.msra.mxu0 0.0
    %368 = vmatprep.subr.mxu0 0.0
    %369 = vmatpush2.msra.mxu0 0.0
    %370 = vmatprep.subr.mxu0 0.0
    %371 = vmatpush2.msra.mxu0 0.0
    %372 = vmatprep.subr.mxu0 0.0
    %373 = vmatpush2.msra.mxu0 0.0
    %374 = vmatprep.subr.mxu0 0.0
    %375 = vmatpush2.msra.mxu0 0.0
    %376 = vmatprep.subr.mxu0 0.0
    %377 = vmatpush2.msra.mxu0 0.0
    %378 = vmatprep.subr.mxu0 0.0
    %379 = vmatpush2.msra.mxu0 0.0
    %380 = vmatprep.subr.mxu0 0.0
    %381 = vmatpush2.msra.mxu0 0.0
    %382 = vmatprep.subr.mxu0 0.0
    %383 = vmatpush2.msra.mxu0 0.0
    %384 = vmatprep.subr.mxu0 0.0
    %385 = vmatpush2.msra.mxu0 0.0
    %386 = vmatprep.subr.mxu0 0.0
    %387 = vmatpush2.msra.mxu0 0.0
    %388 = vmatprep.subr.mxu0 0.0
    %389 = vmatpush2.msra.mxu0 0.0
    %390 = vmatprep.subr.mxu0 0.0
    %391 = vmatpush2.msra.mxu0 0.0
    %392 = vmatprep.subr.mxu0 0.0
    %393 = vmatpush2.msra.mxu0 0.0
    %394 = vmatprep.subr.mxu0 0.0
    %395 = vmatpush2.msra.mxu0 0.0
    %396 = vmatprep.mubr.f32.mxu0 0.0
    %397 = vmatmul.mubr.f32.gmra.mxu0 %v300
    %v398 = vpop.f32.mrf.mxu0
    %v399 = vadd.f32 0.0, %v398
    %v400 = vpop.f32.mrf.mxu0
    %401 = vmatprep.mubr.f32.mxu0 0.0
    %402 = vmatmul.mubr.f32.gmra.mxu0 %v301
    %v403 = vpop.f32.mrf.mxu0
    %v404 = vadd.f32 0.0, %v403
    %v405 = vpop.f32.mrf.mxu0
    %406 = vmatprep.mubr.f32.mxu0 0.0
    %407 = vmatmul.mubr.f32.gmra.mxu0 %v302
    %v408 = vpop.f32.mrf.mxu0
    %v409 = vadd.f32 0.0, %v408
    %v410 = vpop.f32.mrf.mxu0
    %411 = vmatprep.mubr.f32.mxu0 0.0
    %412 = vmatmul.mubr.f32.gmra.mxu0 %v303
    %v413 = vpop.f32.mrf.mxu0
    %v414 = vadd.f32 0.0, %v413
    %v415 = vpop.f32.mrf.mxu0
    %416 = vmatprep.mubr.f32.mxu0 0.0
    %417 = vmatmul.mubr.f32.gmra.mxu0 %v304
    %v418 = vpop.f32.mrf.mxu0
    %v419 = vadd.f32 0.0, %v418
    %v420 = vpop.f32.mrf.mxu0
    %421 = vmatprep.mubr.f32.mxu0 0.0
    %422 = vmatmul.mubr.f32.gmra.mxu0 %v305
    %v423 = vpop.f32.mrf.mxu0
    %v424 = vadd.f32 0.0, %v423
    %v425 = vpop.f32.mrf.mxu0
    %426 = vmatprep.mubr.f32.mxu0 0.0
    %427 = vmatmul.mubr.f32.gmra.mxu0 %v306
    %v428 = vpop.f32.mrf.mxu0
    %v429 = vadd.f32 0.0, %v428
    %v430 = vpop.f32.mrf.mxu0
    %431 = vmatprep.mubr.f32.mxu0 0.0
    %432 = vmatmul.mubr.f32.gmra.mxu0 %v307
    %v433 = vpop.f32.mrf.mxu0
    %v434 = vadd.f32 0.0, %v433
    %v435 = vpop.f32.mrf.mxu0
    %436 = vmatprep.mubr.f32.mxu0 0.0
    %437 = vmatmul.mubr.f32.gmra.mxu0 %v308
    %v438 = vpop.f32.mrf.mxu0
    %v439 = vadd.f32 0.0, %v438
    %v440 = vpop.f32.mrf.mxu0
    %441 = vmatprep.mubr.f32.mxu0 0.0
    %442 = vmatmul.mubr.f32.gmra.mxu0 %v309
    %v443 = vpop.f32.mrf.mxu0
    %v444 = vadd.f32 0.0, %v443
    %v445 = vpop.f32.mrf.mxu0
    %446 = vmatprep.mubr.f32.mxu0 0.0
    %447 = vmatmul.mubr.f32.gmra.mxu0 %v310
    %v448 = vpop.f32.mrf.mxu0
    %v449 = vadd.f32 0.0, %v448
    %v450 = vpop.f32.mrf.mxu0
    %451 = vmatprep.mubr.f32.mxu0 0.0
    %452 = vmatmul.mubr.f32.gmra.mxu0 %v311
    %v453 = vpop.f32.mrf.mxu0
    %v454 = vadd.f32 0.0, %v453
    %v455 = vpop.f32.mrf.mxu0
    %456 = vmatprep.mubr.f32.mxu0 0.0
    %457 = vmatmul.mubr.f32.gmra.mxu0 %v312
    %v458 = vpop.f32.mrf.mxu0
    %v459 = vadd.f32 0.0, %v458
    %v460 = vpop.f32.mrf.mxu0
    %461 = vmatprep.mubr.f32.mxu0 0.0
    %462 = vmatmul.mubr.f32.gmra.mxu0 %v313
    %v463 = vpop.f32.mrf.mxu0
    %v464 = vadd.f32 0.0, %v463
    %v465 = vpop.f32.mrf.mxu0
    %466 = vmatprep.mubr.f32.mxu0 0.0
    %467 = vmatmul.mubr.f32.gmra.mxu0 %v314
    %v468 = vpop.f32.mrf.mxu0
    %v469 = vadd.f32 0.0, %v468
    %v470 = vpop.f32.mrf.mxu0
    %471 = vmatprep.mubr.f32.mxu0 0.0
    %472 = vmatmul.mubr.f32.gmra.mxu0 %v315
    %v473 = vpop.f32.mrf.mxu0
    %v474 = vadd.f32 0.0, %v473
    %v475 = vpop.f32.mrf.mxu0
    %476 = vdwg.mxu0
    %v477 = vxor.u32 %v399, 2147483648
    %v478 = vxor.u32 %v404, 2147483648
    %v479 = vxor.u32 %v409, 2147483648
    %v480 = vxor.u32 %v414, 2147483648
    %v481 = vxor.u32 %v419, 2147483648
    %v482 = vxor.u32 %v424, 2147483648
    %v483 = vxor.u32 %v429, 2147483648
    %v484 = vxor.u32 %v434, 2147483648
    %v485 = vxor.u32 %v439, 2147483648
    %v486 = vxor.u32 %v444, 2147483648
    %v487 = vxor.u32 %v449, 2147483648
    %v488 = vxor.u32 %v454, 2147483648
    %v489 = vxor.u32 %v459, 2147483648
    %v490 = vxor.u32 %v464, 2147483648
    %v491 = vxor.u32 %v469, 2147483648
    %v492 = vxor.u32 %v474, 2147483648
    %v493 = vmul.f32 %v477, 1.442695
    %v494 = vpow.pop %v493
    %v495 = vmul.f32 %v478, 1.442695
    %v496 = vpow.pop %v495
    %v497 = vmul.f32 %v479, 1.442695
    %v498 = vpow.pop %v497
    %v499 = vmul.f32 %v480, 1.442695
    %v500 = vpow.pop %v499
    %v501 = vmul.f32 %v481, 1.442695
    %v502 = vpow.pop %v501
    %v503 = vmul.f32 %v482, 1.442695
    %v504 = vpow.pop %v503
    %v505 = vmul.f32 %v483, 1.442695
    %v506 = vpow.pop %v505
    %v507 = vmul.f32 %v484, 1.442695
    %v508 = vpow.pop %v507
    %v509 = vmul.f32 %v485, 1.442695
    %v510 = vpow.pop %v509
    %v511 = vmul.f32 %v486, 1.442695
    %v512 = vpow.pop %v511
    %v513 = vmul.f32 %v487, 1.442695
    %v514 = vpow.pop %v513
    %v515 = vmul.f32 %v488, 1.442695
    %v516 = vpow.pop %v515
    %v517 = vmul.f32 %v489, 1.442695
    %v518 = vpow.pop %v517
    %v519 = vmul.f32 %v490, 1.442695
    %v520 = vpow.pop %v519
    %v521 = vmul.f32 %v491, 1.442695
    %v522 = vpow.pop %v521
    %v523 = vmul.f32 %v492, 1.442695
    %v524 = vpow.pop %v523
    %v525 = vadd.f32 %v494, 1.0
    %v526 = vadd.f32 %v496, 1.0
    %v527 = vadd.f32 %v498, 1.0
    %v528 = vadd.f32 %v500, 1.0
    %v529 = vadd.f32 %v502, 1.0
    %v530 = vadd.f32 %v504, 1.0
    %v531 = vadd.f32 %v506, 1.0
    %v532 = vadd.f32 %v508, 1.0
    %v533 = vadd.f32 %v510, 1.0
    %v534 = vadd.f32 %v512, 1.0
    %v535 = vadd.f32 %v514, 1.0
    %v536 = vadd.f32 %v516, 1.0
    %v537 = vadd.f32 %v518, 1.0
    %v538 = vadd.f32 %v520, 1.0
    %v539 = vadd.f32 %v522, 1.0
    %v540 = vadd.f32 %v524, 1.0
    %v541 = vrcp.pop %v525
    %v542 = vmul.f32 1.0, %v541
    %v543 = vrcp.pop %v526
    %v544 = vmul.f32 1.0, %v543
    %v545 = vrcp.pop %v527
    %v546 = vmul.f32 1.0, %v545
    %v547 = vrcp.pop %v528
    %v548 = vmul.f32 1.0, %v547
    %v549 = vrcp.pop %v529
    %v550 = vmul.f32 1.0, %v549
    %v551 = vrcp.pop %v530
    %v552 = vmul.f32 1.0, %v551
    %v553 = vrcp.pop %v531
    %v554 = vmul.f32 1.0, %v553
    %v555 = vrcp.pop %v532
    %v556 = vmul.f32 1.0, %v555
    %v557 = vrcp.pop %v533
    %v558 = vmul.f32 1.0, %v557
    %v559 = vrcp.pop %v534
    %v560 = vmul.f32 1.0, %v559
    %v561 = vrcp.pop %v535
    %v562 = vmul.f32 1.0, %v561
    %v563 = vrcp.pop %v536
    %v564 = vmul.f32 1.0, %v563
    %v565 = vrcp.pop %v537
    %v566 = vmul.f32 1.0, %v565
    %v567 = vrcp.pop %v538
    %v568 = vmul.f32 1.0, %v567
    %v569 = vrcp.pop %v539
    %v570 = vmul.f32 1.0, %v569
    %v571 = vrcp.pop %v540
    %v572 = vmul.f32 1.0, %v571
    %v573 = vmul.f32 %v399, %v542
    %v574 = vmul.f32 %v404, %v544
    %v575 = vmul.f32 %v409, %v546
    %v576 = vmul.f32 %v414, %v548
    %v577 = vmul.f32 %v419, %v550
    %v578 = vmul.f32 %v424, %v552
    %v579 = vmul.f32 %v429, %v554
    %v580 = vmul.f32 %v434, %v556
    %v581 = vmul.f32 %v439, %v558
    %v582 = vmul.f32 %v444, %v560
    %v583 = vmul.f32 %v449, %v562
    %v584 = vmul.f32 %v454, %v564
    %v585 = vmul.f32 %v459, %v566
    %v586 = vmul.f32 %v464, %v568
    %v587 = vmul.f32 %v469, %v570
    %v588 = vmul.f32 %v474, %v572
    %v589 = vld [vmem:[#allocation7] sm:$0xff]
    %v590 = vld [vmem:[#allocation7 + $0x8] sm:$0xff]
    %v591 = vld [vmem:[#allocation7 + $0x10] sm:$0xff]
    %v592 = vld [vmem:[#allocation7 + $0x18] sm:$0xff]
    %v593 = vld [vmem:[#allocation7 + $0x20] sm:$0xff]
    %v594 = vld [vmem:[#allocation7 + $0x28] sm:$0xff]
    %v595 = vld [vmem:[#allocation7 + $0x30] sm:$0xff]
    %v596 = vld [vmem:[#allocation7 + $0x38] sm:$0xff]
    %v597 = vld [vmem:[#allocation7 + $0x40] sm:$0xff]
    %v598 = vld [vmem:[#allocation7 + $0x48] sm:$0xff]
    %v599 = vld [vmem:[#allocation7 + $0x50] sm:$0xff]
    %v600 = vld [vmem:[#allocation7 + $0x58] sm:$0xff]
    %v601 = vld [vmem:[#allocation7 + $0x60] sm:$0xff]
    %v602 = vld [vmem:[#allocation7 + $0x68] sm:$0xff]
    %v603 = vld [vmem:[#allocation7 + $0x70] sm:$0xff]
    %v604 = vld [vmem:[#allocation7 + $0x78] sm:$0xff]
    %v605 = vld [vmem:[#allocation8] sm:$0x1]
    %v606 = vlaneseq
    %v607 = vshrl.u32 %v606, 7
    %v608 = vsub.s32 0, %v607
    %v609 = vrot.slane %v605, %v608
    %610 = vmatprep.subr.mxu0 0.0
    %611 = vmatpush1.msra.mxu0 %v604
    %612 = vmatprep.subr.mxu0 0.0
    %613 = vmatpush1.msra.mxu0 %v603
    %614 = vmatprep.subr.mxu0 0.0
    %615 = vmatpush1.msra.mxu0 %v602
    %616 = vmatprep.subr.mxu0 0.0
    %617 = vmatpush1.msra.mxu0 %v601
    %618 = vmatprep.subr.mxu0 0.0
    %619 = vmatpush1.msra.mxu0 %v600
    %620 = vmatprep.subr.mxu0 0.0
    %621 = vmatpush1.msra.mxu0 %v599
    %622 = vmatprep.subr.mxu0 0.0
    %623 = vmatpush1.msra.mxu0 %v598
    %624 = vmatprep.subr.mxu0 0.0
    %625 = vmatpush1.msra.mxu0 %v597
    %626 = vmatprep.subr.mxu0 0.0
    %627 = vmatpush1.msra.mxu0 %v596
    %628 = vmatprep.subr.mxu0 0.0
    %629 = vmatpush1.msra.mxu0 %v595
    %630 = vmatprep.subr.mxu0 0.0
    %631 = vmatpush1.msra.mxu0 %v594
    %632 = vmatprep.subr.mxu0 0.0
    %633 = vmatpush1.msra.mxu0 %v593
    %634 = vmatprep.subr.mxu0 0.0
    %635 = vmatpush1.msra.mxu0 %v592
    %636 = vmatprep.subr.mxu0 0.0
    %637 = vmatpush1.msra.mxu0 %v591
    %638 = vmatprep.subr.mxu0 0.0
    %639 = vmatpush1.msra.mxu0 %v590
    %640 = vmatprep.subr.mxu0 0.0
    %641 = vmatpush1.msra.mxu0 %v589
    %642 = vmatprep.subr.mxu0 0.0
    %643 = vmatpush2.msra.mxu0 0.0
    %644 = vmatprep.subr.mxu0 0.0
    %645 = vmatpush2.msra.mxu0 0.0
    %646 = vmatprep.subr.mxu0 0.0
    %647 = vmatpush2.msra.mxu0 0.0
    %648 = vmatprep.subr.mxu0 0.0
    %649 = vmatpush2.msra.mxu0 0.0
    %650 = vmatprep.subr.mxu0 0.0
    %651 = vmatpush2.msra.mxu0 0.0
    %652 = vmatprep.subr.mxu0 0.0
    %653 = vmatpush2.msra.mxu0 0.0
    %654 = vmatprep.subr.mxu0 0.0
    %655 = vmatpush2.msra.mxu0 0.0
    %656 = vmatprep.subr.mxu0 0.0
    %657 = vmatpush2.msra.mxu0 0.0
    %658 = vmatprep.subr.mxu0 0.0
    %659 = vmatpush2.msra.mxu0 0.0
    %660 = vmatprep.subr.mxu0 0.0
    %661 = vmatpush2.msra.mxu0 0.0
    %662 = vmatprep.subr.mxu0 0.0
    %663 = vmatpush2.msra.mxu0 0.0
    %664 = vmatprep.subr.mxu0 0.0
    %665 = vmatpush2.msra.mxu0 0.0
    %666 = vmatprep.subr.mxu0 0.0
    %667 = vmatpush2.msra.mxu0 0.0
    %668 = vmatprep.subr.mxu0 0.0
    %669 = vmatpush2.msra.mxu0 0.0
    %670 = vmatprep.subr.mxu0 0.0
    %671 = vmatpush2.msra.mxu0 0.0
    %672 = vmatprep.subr.mxu0 0.0
    %673 = vmatpush2.msra.mxu0 0.0
    %674 = vmatprep.mubr.f32.mxu0 0.0
    %675 = vmatmul.mubr.f32.gmra.mxu0 %v573
    %v676 = vpop.f32.mrf.mxu0
    %v677 = vadd.f32 %v609, %v676
    %v678 = vpop.f32.mrf.mxu0
    %679 = vmatprep.mubr.f32.mxu0 0.0
    %680 = vmatmul.mubr.f32.gmra.mxu0 %v574
    %v681 = vpop.f32.mrf.mxu0
    %v682 = vadd.f32 %v609, %v681
    %v683 = vpop.f32.mrf.mxu0
    %684 = vmatprep.mubr.f32.mxu0 0.0
    %685 = vmatmul.mubr.f32.gmra.mxu0 %v575
    %v686 = vpop.f32.mrf.mxu0
    %v687 = vadd.f32 %v609, %v686
    %v688 = vpop.f32.mrf.mxu0
    %689 = vmatprep.mubr.f32.mxu0 0.0
    %690 = vmatmul.mubr.f32.gmra.mxu0 %v576
    %v691 = vpop.f32.mrf.mxu0
    %v692 = vadd.f32 %v609, %v691
    %v693 = vpop.f32.mrf.mxu0
    %694 = vmatprep.mubr.f32.mxu0 0.0
    %695 = vmatmul.mubr.f32.gmra.mxu0 %v577
    %v696 = vpop.f32.mrf.mxu0
    %v697 = vadd.f32 %v609, %v696
    %v698 = vpop.f32.mrf.mxu0
    %699 = vmatprep.mubr.f32.mxu0 0.0
    %700 = vmatmul.mubr.f32.gmra.mxu0 %v578
    %v701 = vpop.f32.mrf.mxu0
    %v702 = vadd.f32 %v609, %v701
    %v703 = vpop.f32.mrf.mxu0
    %704 = vmatprep.mubr.f32.mxu0 0.0
    %705 = vmatmul.mubr.f32.gmra.mxu0 %v579
    %v706 = vpop.f32.mrf.mxu0
    %v707 = vadd.f32 %v609, %v706
    %v708 = vpop.f32.mrf.mxu0
    %709 = vmatprep.mubr.f32.mxu0 0.0
    %710 = vmatmul.mubr.f32.gmra.mxu0 %v580
    %v711 = vpop.f32.mrf.mxu0
    %v712 = vadd.f32 %v609, %v711
    %v713 = vpop.f32.mrf.mxu0
    %714 = vmatprep.mubr.f32.mxu0 0.0
    %715 = vmatmul.mubr.f32.gmra.mxu0 %v581
    %v716 = vpop.f32.mrf.mxu0
    %v717 = vadd.f32 %v609, %v716
    %v718 = vpop.f32.mrf.mxu0
    %719 = vmatprep.mubr.f32.mxu0 0.0
    %720 = vmatmul.mubr.f32.gmra.mxu0 %v582
    %v721 = vpop.f32.mrf.mxu0
    %v722 = vadd.f32 %v609, %v721
    %v723 = vpop.f32.mrf.mxu0
    %724 = vmatprep.mubr.f32.mxu0 0.0
    %725 = vmatmul.mubr.f32.gmra.mxu0 %v583
    %v726 = vpop.f32.mrf.mxu0
    %v727 = vadd.f32 %v609, %v726
    %v728 = vpop.f32.mrf.mxu0
    %729 = vmatprep.mubr.f32.mxu0 0.0
    %730 = vmatmul.mubr.f32.gmra.mxu0 %v584
    %v731 = vpop.f32.mrf.mxu0
    %v732 = vadd.f32 %v609, %v731
    %v733 = vpop.f32.mrf.mxu0
    %734 = vmatprep.mubr.f32.mxu0 0.0
    %735 = vmatmul.mubr.f32.gmra.mxu0 %v585
    %v736 = vpop.f32.mrf.mxu0
    %v737 = vadd.f32 %v609, %v736
    %v738 = vpop.f32.mrf.mxu0
    %739 = vmatprep.mubr.f32.mxu0 0.0
    %740 = vmatmul.mubr.f32.gmra.mxu0 %v586
    %v741 = vpop.f32.mrf.mxu0
    %v742 = vadd.f32 %v609, %v741
    %v743 = vpop.f32.mrf.mxu0
    %744 = vmatprep.mubr.f32.mxu0 0.0
    %745 = vmatmul.mubr.f32.gmra.mxu0 %v587
    %v746 = vpop.f32.mrf.mxu0
    %v747 = vadd.f32 %v609, %v746
    %v748 = vpop.f32.mrf.mxu0
    %749 = vmatprep.mubr.f32.mxu0 0.0
    %750 = vmatmul.mubr.f32.gmra.mxu0 %v588
    %v751 = vpop.f32.mrf.mxu0
    %v752 = vadd.f32 %v609, %v751
    %v753 = vpop.f32.mrf.mxu0
    %754 = vdwg.mxu0
    %v755 = vxor.u32 %v677, 2147483648
    %v756 = vxor.u32 %v682, 2147483648
    %v757 = vxor.u32 %v687, 2147483648
    %v758 = vxor.u32 %v692, 2147483648
    %v759 = vxor.u32 %v697, 2147483648
    %v760 = vxor.u32 %v702, 2147483648
    %v761 = vxor.u32 %v707, 2147483648
    %v762 = vxor.u32 %v712, 2147483648
    %v763 = vxor.u32 %v717, 2147483648
    %v764 = vxor.u32 %v722, 2147483648
    %v765 = vxor.u32 %v727, 2147483648
    %v766 = vxor.u32 %v732, 2147483648
    %v767 = vxor.u32 %v737, 2147483648
    %v768 = vxor.u32 %v742, 2147483648
    %v769 = vxor.u32 %v747, 2147483648
    %v770 = vxor.u32 %v752, 2147483648
    %v771 = vmul.f32 %v755, 1.442695
    %v772 = vpow.pop %v771
    %v773 = vmul.f32 %v756, 1.442695
    %v774 = vpow.pop %v773
    %v775 = vmul.f32 %v757, 1.442695
    %v776 = vpow.pop %v775
    %v777 = vmul.f32 %v758, 1.442695
    %v778 = vpow.pop %v777
    %v779 = vmul.f32 %v759, 1.442695
    %v780 = vpow.pop %v779
    %v781 = vmul.f32 %v760, 1.442695
    %v782 = vpow.pop %v781
    %v783 = vmul.f32 %v761, 1.442695
    %v784 = vpow.pop %v783
    %v785 = vmul.f32 %v762, 1.442695
    %v786 = vpow.pop %v785
    %v787 = vmul.f32 %v763, 1.442695
    %v788 = vpow.pop %v787
    %v789 = vmul.f32 %v764, 1.442695
    %v790 = vpow.pop %v789
    %v791 = vmul.f32 %v765, 1.442695
    %v792 = vpow.pop %v791
    %v793 = vmul.f32 %v766, 1.442695
    %v794 = vpow.pop %v793
    %v795 = vmul.f32 %v767, 1.442695
    %v796 = vpow.pop %v795
    %v797 = vmul.f32 %v768, 1.442695
    %v798 = vpow.pop %v797
    %v799 = vmul.f32 %v769, 1.442695
    %v800 = vpow.pop %v799
    %v801 = vmul.f32 %v770, 1.442695
    %v802 = vpow.pop %v801
    %v803 = vadd.f32 %v772, 1.0
    %v804 = vadd.f32 %v774, 1.0
    %v805 = vadd.f32 %v776, 1.0
    %v806 = vadd.f32 %v778, 1.0
    %v807 = vadd.f32 %v780, 1.0
    %v808 = vadd.f32 %v782, 1.0
    %v809 = vadd.f32 %v784, 1.0
    %v810 = vadd.f32 %v786, 1.0
    %v811 = vadd.f32 %v788, 1.0
    %v812 = vadd.f32 %v790, 1.0
    %v813 = vadd.f32 %v792, 1.0
    %v814 = vadd.f32 %v794, 1.0
    %v815 = vadd.f32 %v796, 1.0
    %v816 = vadd.f32 %v798, 1.0
    %v817 = vadd.f32 %v800, 1.0
    %v818 = vadd.f32 %v802, 1.0
    %v819 = vrcp.pop %v803
    %v820 = vmul.f32 1.0, %v819
    %v821 = vrcp.pop %v804
    %v822 = vmul.f32 1.0, %v821
    %v823 = vrcp.pop %v805
    %v824 = vmul.f32 1.0, %v823
    %v825 = vrcp.pop %v806
    %v826 = vmul.f32 1.0, %v825
    %v827 = vrcp.pop %v807
    %v828 = vmul.f32 1.0, %v827
    %v829 = vrcp.pop %v808
    %v830 = vmul.f32 1.0, %v829
    %v831 = vrcp.pop %v809
    %v832 = vmul.f32 1.0, %v831
    %v833 = vrcp.pop %v810
    %v834 = vmul.f32 1.0, %v833
    %v835 = vrcp.pop %v811
    %v836 = vmul.f32 1.0, %v835
    %v837 = vrcp.pop %v812
    %v838 = vmul.f32 1.0, %v837
    %v839 = vrcp.pop %v813
    %v840 = vmul.f32 1.0, %v839
    %v841 = vrcp.pop %v814
    %v842 = vmul.f32 1.0, %v841
    %v843 = vrcp.pop %v815
    %v844 = vmul.f32 1.0, %v843
    %v845 = vrcp.pop %v816
    %v846 = vmul.f32 1.0, %v845
    %v847 = vrcp.pop %v817
    %v848 = vmul.f32 1.0, %v847
    %v849 = vrcp.pop %v818
    %v850 = vmul.f32 1.0, %v849
    %v851 = vld [vmem:[#allocation8 + $0x1] sm:$0x1]
    %v852 = vlaneseq
    %v853 = vshrl.u32 %v852, 7
    %v854 = vsub.s32 0, %v853
    %v855 = vrot.slane %v851, %v854
    %v856 = vmul.f32 %v820, %v855
    %v857 = vmul.f32 %v822, %v855
    %v858 = vmul.f32 %v824, %v855
    %v859 = vmul.f32 %v826, %v855
    %v860 = vmul.f32 %v828, %v855
    %v861 = vmul.f32 %v830, %v855
    %v862 = vmul.f32 %v832, %v855
    %v863 = vmul.f32 %v834, %v855
    %v864 = vmul.f32 %v836, %v855
    %v865 = vmul.f32 %v838, %v855
    %v866 = vmul.f32 %v840, %v855
    %v867 = vmul.f32 %v842, %v855
    %v868 = vmul.f32 %v844, %v855
    %v869 = vmul.f32 %v846, %v855
    %v870 = vmul.f32 %v848, %v855
    %v871 = vmul.f32 %v850, %v855
    %v872 = vld [vmem:[#allocation8 + $0x2] sm:$0x1]
    %v873 = vlaneseq
    %v874 = vshrl.u32 %v873, 7
    %v875 = vsub.s32 0, %v874
    %v876 = vrot.slane %v872, %v875
    %v877 = vadd.f32 %v856, %v876
    %v878 = vadd.f32 %v857, %v876
    %v879 = vadd.f32 %v858, %v876
    %v880 = vadd.f32 %v859, %v876
    %v881 = vadd.f32 %v860, %v876
    %v882 = vadd.f32 %v861, %v876
    %v883 = vadd.f32 %v862, %v876
    %v884 = vadd.f32 %v863, %v876
    %v885 = vadd.f32 %v864, %v876
    %v886 = vadd.f32 %v865, %v876
    %v887 = vadd.f32 %v866, %v876
    %v888 = vadd.f32 %v867, %v876
    %v889 = vadd.f32 %v868, %v876
    %v890 = vadd.f32 %v869, %v876
    %v891 = vadd.f32 %v870, %v876
    %v892 = vadd.f32 %v871, %v876
    %v893 = vmul.f32 %v820, %v877
    %v894 = vmul.f32 %v822, %v878
    %v895 = vmul.f32 %v824, %v879
    %v896 = vmul.f32 %v826, %v880
    %v897 = vmul.f32 %v828, %v881
    %v898 = vmul.f32 %v830, %v882
    %v899 = vmul.f32 %v832, %v883
    %v900 = vmul.f32 %v834, %v884
    %v901 = vmul.f32 %v836, %v885
    %v902 = vmul.f32 %v838, %v886
    %v903 = vmul.f32 %v840, %v887
    %v904 = vmul.f32 %v842, %v888
    %v905 = vmul.f32 %v844, %v889
    %v906 = vmul.f32 %v846, %v890
    %v907 = vmul.f32 %v848, %v891
    %v908 = vmul.f32 %v850, %v892
    %v909 = vadd.f32 %v893, %v284
    %v910 = vadd.f32 %v894, %v285
    %v911 = vadd.f32 %v895, %v286
    %v912 = vadd.f32 %v896, %v287
    %v913 = vadd.f32 %v897, %v288
    %v914 = vadd.f32 %v898, %v289
    %v915 = vadd.f32 %v899, %v290
    %v916 = vadd.f32 %v900, %v291
    %v917 = vadd.f32 %v901, %v292
    %v918 = vadd.f32 %v902, %v293
    %v919 = vadd.f32 %v903, %v294
    %v920 = vadd.f32 %v904, %v295
    %v921 = vadd.f32 %v905, %v296
    %v922 = vadd.f32 %v906, %v297
    %v923 = vadd.f32 %v907, %v298
    %v924 = vadd.f32 %v908, %v299
    %925 = vst [vmem:[#allocation10] sm:$0xff] %v909
    %926 = vst [vmem:[#allocation10 + $0x8] sm:$0xff] %v910
    %927 = vst [vmem:[#allocation10 + $0x10] sm:$0xff] %v911
    %928 = vst [vmem:[#allocation10 + $0x18] sm:$0xff] %v912
    %929 = vst [vmem:[#allocation10 + $0x20] sm:$0xff] %v913
    %930 = vst [vmem:[#allocation10 + $0x28] sm:$0xff] %v914
    %931 = vst [vmem:[#allocation10 + $0x30] sm:$0xff] %v915
    %932 = vst [vmem:[#allocation10 + $0x38] sm:$0xff] %v916
    %933 = vst [vmem:[#allocation10 + $0x40] sm:$0xff] %v917
    %934 = vst [vmem:[#allocation10 + $0x48] sm:$0xff] %v918
    %935 = vst [vmem:[#allocation10 + $0x50] sm:$0xff] %v919
    %936 = vst [vmem:[#allocation10 + $0x58] sm:$0xff] %v920
    %937 = vst [vmem:[#allocation10 + $0x60] sm:$0xff] %v921
    %938 = vst [vmem:[#allocation10 + $0x68] sm:$0xff] %v922
    %939 = vst [vmem:[#allocation10 + $0x70] sm:$0xff] %v923
    %940 = vst [vmem:[#allocation10 + $0x78] sm:$0xff] %v924
    // Predicated region
    $region34: #{tpu_custom_call.1} parent=1 // pred_check
      _
    $region35: #{tpu_custom_call.1} parent=1 // pred_check_branch
      %942 = sbr.rel (0) target = $region37
    $region36: #{tpu_custom_call.1} parent=1 // pred_region
      %s944 = ssub.s32 2048, 2048
      %945 = vsyncadd [#allocation4], %s944
      %s946 = sshll.u32 [#allocation10], 4
      %s947 = int_to_ptr.vmem [resolvable:$true] %s946
      %952 = dma.vmem_to_hbm [thread:$0]  %s947, 2048, %s4, [#allocation4], 128, 128, 8
    $region37: #{tpu_custom_call.1} parent=1 // pred_fallthru
      _
    // Predicated region
    $region38: #{tpu_custom_call.1} parent=1 // pred_check
      _
    $region39: #{tpu_custom_call.1} parent=1 // pred_check_branch
      %954 = sbr.rel (0) target = $region41
    $region40: #{tpu_custom_call.1} parent=1 // pred_region
      %955 = dma.done [#allocation4], 2048
    $region41: #{tpu_custom_call.1} parent=1 // pred_fallthru
      _
    %956 = vsyncpa [#allocation3], 1
    %957 = vsyncpa [#allocation6], 1
    %958 = vsyncpa [#allocation9], 1
    %959 = vsyncpa [#allocation4], 1

</llo_original>
